<compile_context>
chip_gen: v7x
topology: tpu7x:2x2x1
jax: 0.10.0
libtpu: 0.0.40
codegen_flags: <defaults>
</compile_context>

<pallas_src>
import jax
import jax.numpy as jnp
from jax import lax
from jax.experimental import pallas as pl
from jax.experimental.pallas import tpu as pltpu


def _round_up(x, m):
    return ((x + m - 1) // m) * m


# ------------------------- encoder kernel -------------------------
def _encoder_kernel(attr_ref, wb_ref, bb_ref, wm_ref, bm_ref, wl_ref, bl_ref,
                    noise_ref, z_ref):
    attr = attr_ref[...]

    # fc_base + ReLU
    hidden = jnp.dot(attr, wb_ref[...], preferred_element_type=jnp.float32)
    hidden = jnp.maximum(hidden + bb_ref[...], 0.0)

    # fc_mean + ReLU
    mean = jnp.dot(hidden, wm_ref[...], preferred_element_type=jnp.float32)
    mean = jnp.maximum(mean + bm_ref[...], 0.0)

    # fc_logstd (no activation)
    logstd = jnp.dot(hidden, wl_ref[...], preferred_element_type=jnp.float32)
    logstd = logstd + bl_ref[...]

    # reparameterization: Z = noise * exp(logstd) + mean
    z_ref[...] = (noise_ref[...] * jnp.exp(logstd) + mean).astype(z_ref.dtype)


# ------------------------- decoder kernel -------------------------
def _decoder_kernel(zrow_ref, zcol_ref, adj_ref):
    # Z_row @ Z_col.T expressed as a contraction over the last dim of both
    # operands -> MXU consumes the "RHS transposed" form directly, no XLU
    # transpose / relayout of the column tile.
    adj_ref[...] = lax.dot_general(
        zrow_ref[...], zcol_ref[...],
        dimension_numbers=(((1,), (1,)), ((), ())),
        preferred_element_type=jnp.float32,
    ).astype(adj_ref.dtype)


def faeaug_forward(attr, w_base, b_base, w_mean, b_mean, w_logstd, b_logstd,
                   noise, *, row_tile=512):
    n, d = attr.shape
    h = w_base.shape[1]
    z = w_mean.shape[1]

    # Lane-dense padding. Zero padding is exact:
    #   * zero weight cols + zero bias  -> padded hidden/mean/logstd cols are 0
    #   * zero noise cols               -> padded Z cols are 0 (safe z-contraction)
    #   * padded rows only touch adj rows/cols >= n, which are sliced away.
    n_pad = _round_up(n, 128)
    tile = min(row_tile, n_pad)
    n_pad = _round_up(n_pad, tile)
    d_pad = _round_up(d, 128)
    h_pad = _round_up(h, 128)
    z_pad = _round_up(z, 128)

    f32 = jnp.float32
    attr_p = jnp.zeros((n_pad, d_pad), f32).at[:n, :d].set(attr.astype(f32))
    wb_p = jnp.zeros((d_pad, h_pad), f32).at[:d, :h].set(w_base)
    bb_p = jnp.zeros((1, h_pad), f32).at[:, :h].set(b_base)
    wm_p = jnp.zeros((h_pad, z_pad), f32).at[:h, :z].set(w_mean)
    bm_p = jnp.zeros((1, z_pad), f32).at[:, :z].set(b_mean)
    wl_p = jnp.zeros((h_pad, z_pad), f32).at[:h, :z].set(w_logstd)
    bl_p = jnp.zeros((1, z_pad), f32).at[:, :z].set(b_logstd)
    noise_p = jnp.zeros((n_pad, z_pad), f32).at[:n, :z].set(noise)

    def full(shape):
        return pl.BlockSpec(shape, lambda i, _s=shape: (0,) * len(_s))

    # ---- encoder: row-tiled, weights resident, Z computed once ----
    Z_pad = pl.pallas_call(
        _encoder_kernel,
        out_shape=jax.ShapeDtypeStruct((n_pad, z_pad), f32),
        grid=(n_pad // tile,),
        in_specs=[
            pl.BlockSpec((tile, d_pad), lambda i: (i, 0)),
            full((d_pad, h_pad)), full((1, h_pad)),
            full((h_pad, z_pad)), full((1, z_pad)),
            full((h_pad, z_pad)), full((1, z_pad)),
            pl.BlockSpec((tile, z_pad), lambda i: (i, 0)),
        ],
        out_specs=pl.BlockSpec((tile, z_pad), lambda i: (i, 0)),
        compiler_params=pltpu.CompilerParams(
            dimension_semantics=("parallel",)),
    )(attr_p, wb_p, bb_p, wm_p, bm_p, wl_p, bl_p, noise_p)

    # ---- decoder: tiled Z @ Z.T, pipelined adj writeback ----
    adj_pad = pl.pallas_call(
        _decoder_kernel,
        out_shape=jax.ShapeDtypeStruct((n_pad, n_pad), f32),
        grid=(n_pad // tile, n_pad // tile),
        in_specs=[
            pl.BlockSpec((tile, z_pad), lambda i, j: (i, 0)),
            pl.BlockSpec((tile, z_pad), lambda i, j: (j, 0)),
        ],
        out_specs=pl.BlockSpec((tile, tile), lambda i, j: (i, j)),
        compiler_params=pltpu.CompilerParams(
            dimension_semantics=("parallel", "parallel")),
    )(Z_pad, Z_pad)

    return adj_pad[:n, :n], Z_pad[:n, :z]


def densify_attr(attr_idx, n, d):
    """torch.sparse.FloatTensor(attr_idx, ones).to_dense() equivalent (duplicates sum)."""
    rows, cols = attr_idx[0], attr_idx[1]
    return jnp.zeros((n, d), jnp.float32).at[rows, cols].add(1.0)


def init_linear(key, fan_in, fan_out):
    """PyTorch nn.Linear default init: U(-1/sqrt(fan_in), 1/sqrt(fan_in))."""
    kw, kb = jax.random.split(key)
    bound = 1.0 / (fan_in ** 0.5)
    w = jax.random.uniform(kw, (fan_in, fan_out), jnp.float32, -bound, bound)
    b = jax.random.uniform(kb, (1, fan_out), jnp.float32, -bound, bound)
    return w, b


if __name__ == "__main__":
    # Small sizes, deliberately NOT multiples of 128 to exercise the padding path;
    # row_tile=128 here so the decoder grid has multiple tiles even at this size
    # (production default is row_tile=512).
    n, dim_feats, dim_h, dim_z = 300, 48, 40, 16
    nnz = 900

    key = jax.random.PRNGKey(0)
    k_attr_r, k_attr_c, k_noise, k_b, k_m, k_l = jax.random.split(key, 6)

    # attr_idx: [2, nnz] sparse COO indices of the (n, d) attribute matrix.
    attr_idx = jnp.stack([
        jax.random.randint(k_attr_r, (nnz,), 0, n),
        jax.random.randint(k_attr_c, (nnz,), 0, dim_feats),
    ])
    # edge_idx is unused by the forward computation itself (only needed for losses).
    attr = densify_attr(attr_idx, n, dim_feats)

    w_base, b_base = init_linear(k_b, dim_feats, dim_h)
    w_mean, b_mean = init_linear(k_m, dim_h, dim_z)
    w_logstd, b_logstd = init_linear(k_l, dim_h, dim_z)

    # gaussian_noise = torch.randn_like(self.mean) -> precompute in JAX glue.
    noise = jax.random.normal(k_noise, (n, dim_z), jnp.float32)

    adj_logits, Z = faeaug_forward(
        attr, w_base, b_base, w_mean, b_mean, w_logstd, b_logstd, noise,
        row_tile=128)
    jax.block_until_ready(adj_logits)

    # Pure-JAX reference (highest precision so the comparison isn't polluted by
    # XLA's default bf16 matmul passes on TPU).
    hp = lax.Precision.HIGHEST
    hidden_ref = jnp.maximum(jnp.dot(attr, w_base, precision=hp) + b_base, 0.0)
    mean_ref = jnp.maximum(jnp.dot(hidden_ref, w_mean, precision=hp) + b_mean, 0.0)
    logstd_ref = jnp.dot(hidden_ref, w_logstd, precision=hp) + b_logstd
    Z_ref = noise * jnp.exp(logstd_ref) + mean_ref
    adj_ref = jnp.dot(Z_ref, Z_ref.T, precision=hp)

    assert jnp.allclose(Z, Z_ref, atol=2e-4, rtol=2e-4)
    assert jnp.allclose(adj_logits, adj_ref, atol=2e-3, rtol=2e-3)

    print("KERNEL_OK")
</pallas_src>

<mosaic_0001>
module attributes {stable_mosaic.version = 11 : i64} {
  func.func @_encoder_kernel(%arg0: i32, %arg1: memref<128x128xf32, #tpu.memory_space<vmem>>, %arg2: memref<128x128xf32, #tpu.memory_space<vmem>>, %arg3: memref<1x128xf32, #tpu.memory_space<vmem>>, %arg4: memref<128x128xf32, #tpu.memory_space<vmem>>, %arg5: memref<1x128xf32, #tpu.memory_space<vmem>>, %arg6: memref<128x128xf32, #tpu.memory_space<vmem>>, %arg7: memref<1x128xf32, #tpu.memory_space<vmem>>, %arg8: memref<128x128xf32, #tpu.memory_space<vmem>>, %arg9: memref<128x128xf32, #tpu.memory_space<vmem>>) attributes {dimension_semantics = [#tpu.dimension_semantics<parallel>], iteration_bounds = array<i64: 3>, scalar_prefetch = 0 : i64, scratch_operands = 0 : i64, tpu.core_type = #tpu.core_type<tc>, window_params = [{transform_indices = @transform_0, window_bounds = array<i64: 128, 128>}, {pipeline_mode = #tpu.pipeline_mode<synchronous>, transform_indices = @transform_1, window_bounds = array<i64: 128, 128>}, {pipeline_mode = #tpu.pipeline_mode<synchronous>, transform_indices = @transform_2, window_bounds = array<i64: 1, 128>}, {pipeline_mode = #tpu.pipeline_mode<synchronous>, transform_indices = @transform_3, window_bounds = array<i64: 128, 128>}, {pipeline_mode = #tpu.pipeline_mode<synchronous>, transform_indices = @transform_4, window_bounds = array<i64: 1, 128>}, {pipeline_mode = #tpu.pipeline_mode<synchronous>, transform_indices = @transform_5, window_bounds = array<i64: 128, 128>}, {pipeline_mode = #tpu.pipeline_mode<synchronous>, transform_indices = @transform_6, window_bounds = array<i64: 1, 128>}, {transform_indices = @transform_7, window_bounds = array<i64: 128, 128>}, {transform_indices = @transform_8, window_bounds = array<i64: 128, 128>}]} {
    %c0 = arith.constant 0 : index
    %c0_0 = arith.constant 0 : index
    %0 = vector.load %arg1[%c0, %c0_0] : memref<128x128xf32, #tpu.memory_space<vmem>>, vector<128x128xf32>
    %c0_1 = arith.constant 0 : index
    %c0_2 = arith.constant 0 : index
    %1 = vector.load %arg2[%c0_1, %c0_2] : memref<128x128xf32, #tpu.memory_space<vmem>>, vector<128x128xf32>
    %cst = arith.constant dense<0.000000e+00> : vector<128x128xf32>
    %2 = tpu.matmul %0, %1, %cst {dimension_numbers = #tpu.dot_dimension_numbers<[1], [0], [0], [1], [0, 0, 1, 1], [], []>} : vector<128x128xf32>, vector<128x128xf32>, vector<128x128xf32> -> vector<128x128xf32>
    %c0_3 = arith.constant 0 : index
    %c0_4 = arith.constant 0 : index
    %3 = vector.load %arg3[%c0_3, %c0_4] : memref<1x128xf32, #tpu.memory_space<vmem>>, vector<1x128xf32>
    %4 = vector.broadcast %3 : vector<1x128xf32> to vector<128x128xf32>
    %5 = arith.addf %2, %4 : vector<128x128xf32>
    %cst_5 = arith.constant 0.000000e+00 : f32
    %6 = vector.broadcast %cst_5 : f32 to vector<128x128xf32>
    %7 = arith.maximumf %5, %6 : vector<128x128xf32>
    %c0_6 = arith.constant 0 : index
    %c0_7 = arith.constant 0 : index
    %8 = vector.load %arg4[%c0_6, %c0_7] : memref<128x128xf32, #tpu.memory_space<vmem>>, vector<128x128xf32>
    %cst_8 = arith.constant dense<0.000000e+00> : vector<128x128xf32>
    %9 = tpu.matmul %7, %8, %cst_8 {dimension_numbers = #tpu.dot_dimension_numbers<[1], [0], [0], [1], [0, 0, 1, 1], [], []>} : vector<128x128xf32>, vector<128x128xf32>, vector<128x128xf32> -> vector<128x128xf32>
    %c0_9 = arith.constant 0 : index
    %c0_10 = arith.constant 0 : index
    %10 = vector.load %arg5[%c0_9, %c0_10] : memref<1x128xf32, #tpu.memory_space<vmem>>, vector<1x128xf32>
    %11 = vector.broadcast %10 : vector<1x128xf32> to vector<128x128xf32>
    %12 = arith.addf %9, %11 : vector<128x128xf32>
    %cst_11 = arith.constant 0.000000e+00 : f32
    %13 = vector.broadcast %cst_11 : f32 to vector<128x128xf32>
    %14 = arith.maximumf %12, %13 : vector<128x128xf32>
    %c0_12 = arith.constant 0 : index
    %c0_13 = arith.constant 0 : index
    %15 = vector.load %arg6[%c0_12, %c0_13] : memref<128x128xf32, #tpu.memory_space<vmem>>, vector<128x128xf32>
    %cst_14 = arith.constant dense<0.000000e+00> : vector<128x128xf32>
    %16 = tpu.matmul %7, %15, %cst_14 {dimension_numbers = #tpu.dot_dimension_numbers<[1], [0], [0], [1], [0, 0, 1, 1], [], []>} : vector<128x128xf32>, vector<128x128xf32>, vector<128x128xf32> -> vector<128x128xf32>
    %c0_15 = arith.constant 0 : index
    %c0_16 = arith.constant 0 : index
    %17 = vector.load %arg7[%c0_15, %c0_16] : memref<1x128xf32, #tpu.memory_space<vmem>>, vector<1x128xf32>
    %18 = vector.broadcast %17 : vector<1x128xf32> to vector<128x128xf32>
    %19 = arith.addf %16, %18 : vector<128x128xf32>
    %c0_17 = arith.constant 0 : index
    %c0_18 = arith.constant 0 : index
    %20 = vector.load %arg8[%c0_17, %c0_18] : memref<128x128xf32, #tpu.memory_space<vmem>>, vector<128x128xf32>
    %21 = math.exp %19 : vector<128x128xf32>
    %22 = arith.mulf %20, %21 : vector<128x128xf32>
    %23 = arith.addf %22, %14 : vector<128x128xf32>
    %c0_19 = arith.constant 0 : index
    %c0_20 = arith.constant 0 : index
    %24 = vector.load %arg9[%c0_19, %c0_20] : memref<128x128xf32, #tpu.memory_space<vmem>>, vector<128x128xf32>
    tpu.vector_store %arg9[%c0_19, %c0_20], %23 {strides = array<i32>} : memref<128x128xf32, #tpu.memory_space<vmem>>, vector<128x128xf32>,
    return
  }
  func.func @transform_0(%arg0: i32) -> (i32, i32) {
    %c0_i32 = arith.constant 0 : i32
    %c0_i32_0 = arith.constant 0 : i32
    return %arg0, %c0_i32 : i32, i32
  }
  func.func @transform_1(%arg0: i32) -> (i32, i32) {
    %c0_i32 = arith.constant 0 : i32
    %c0_i32_0 = arith.constant 0 : i32
    %c0_i32_1 = arith.constant 0 : i32
    return %c0_i32, %c0_i32_0 : i32, i32
  }
  func.func @transform_2(%arg0: i32) -> (i32, i32) {
    %c0_i32 = arith.constant 0 : i32
    %c0_i32_0 = arith.constant 0 : i32
    %c0_i32_1 = arith.constant 0 : i32
    return %c0_i32, %c0_i32_0 : i32, i32
  }
  func.func @transform_3(%arg0: i32) -> (i32, i32) {
    %c0_i32 = arith.constant 0 : i32
    %c0_i32_0 = arith.constant 0 : i32
    %c0_i32_1 = arith.constant 0 : i32
    return %c0_i32, %c0_i32_0 : i32, i32
  }
  func.func @transform_4(%arg0: i32) -> (i32, i32) {
    %c0_i32 = arith.constant 0 : i32
    %c0_i32_0 = arith.constant 0 : i32
    %c0_i32_1 = arith.constant 0 : i32
    return %c0_i32, %c0_i32_0 : i32, i32
  }
  func.func @transform_5(%arg0: i32) -> (i32, i32) {
    %c0_i32 = arith.constant 0 : i32
    %c0_i32_0 = arith.constant 0 : i32
    %c0_i32_1 = arith.constant 0 : i32
    return %c0_i32, %c0_i32_0 : i32, i32
  }
  func.func @transform_6(%arg0: i32) -> (i32, i32) {
    %c0_i32 = arith.constant 0 : i32
    %c0_i32_0 = arith.constant 0 : i32
    %c0_i32_1 = arith.constant 0 : i32
    return %c0_i32, %c0_i32_0 : i32, i32
  }
  func.func @transform_7(%arg0: i32) -> (i32, i32) {
    %c0_i32 = arith.constant 0 : i32
    %c0_i32_0 = arith.constant 0 : i32
    return %arg0, %c0_i32 : i32, i32
  }
  func.func @transform_8(%arg0: i32) -> (i32, i32) {
    %c0_i32 = arith.constant 0 : i32
    %c0_i32_0 = arith.constant 0 : i32
    return %arg0, %c0_i32 : i32, i32
  }
}

</mosaic_0001>

<llo_original>
// kernel: tpu_custom_call.1
$region0: #{tpu_custom_call.1}
  #allocation0 [shape = 'u32[]', space=smem, size = 0x4, offset = 0x4, fixed_abs, tag = 'smem constant byte address 0x4 - core index']
  #allocation1 [shape = 'u32[144,128]{1,0:T(1,128)}', space=vmem, size = 0x12000, scoped, tag = 'internal scratch']
  %s0 = inlined_call_operand.hbm [shape: f32[384,128], index: 0, kind: input, shape index: {}]
  %s1 = inlined_call_operand.hbm [shape: f32[128,128], index: 1, kind: input, shape index: {}]
  %s2 = inlined_call_operand.vmem [shape: f32[1,128], index: 2, kind: input, shape index: {}]
  %s3 = inlined_call_operand.hbm [shape: f32[128,128], index: 3, kind: input, shape index: {}]
  %s4 = inlined_call_operand.vmem [shape: f32[1,128], index: 4, kind: input, shape index: {}]
  %s5 = inlined_call_operand.hbm [shape: f32[128,128], index: 5, kind: input, shape index: {}]
  %s6 = inlined_call_operand.vmem [shape: f32[1,128], index: 6, kind: input, shape index: {}]
  %s7 = inlined_call_operand.hbm [shape: f32[384,128], index: 7, kind: input, shape index: {}]
  %s8 = inlined_call_operand.hbm [shape: f32[384,128], index: 8, kind: output, shape index: {}]
  %s9 = sld [smem:[#allocation0]]
  $region85: #{tpu_custom_call.1} parent=0
    _
  %s11 = ssub.s32 1, %s9
  %s12 = scalar_select 0, %s11, %s9
  $region1: #{tpu_custom_call.1} parent=0
    #allocation2 [shape = 'u8[131072]{0}', space=vmem, size = 0x20000, scoped, tag = 'input window, operand 0']
    #allocation3 [shape = 's32[2]{0}', space=sflag, size = 0x8, scoped, tag = 'scoped memory for tpu_custom_call.1']
    #allocation4 [shape = 's32[2]{0}', space=sflag, size = 0x8, scoped, tag = 'scoped memory for tpu_custom_call.1']
    #allocation5 [shape = 'u8[65536]{0}', space=vmem, size = 0x10000, scoped, tag = 'input window, operand 1, single buffered']
    #allocation6 [shape = 's32[1]{0}', space=sflag, size = 0x4, scoped, tag = 'scoped memory for tpu_custom_call.1']
    #allocation7 [shape = 'u8[65536]{0}', space=vmem, size = 0x10000, scoped, tag = 'input window, operand 3, single buffered']
    #allocation8 [shape = 'u8[65536]{0}', space=vmem, size = 0x10000, scoped, tag = 'input window, operand 5, single buffered']
    #allocation9 [shape = 's32[1]{0}', space=sflag, size = 0x4, scoped, tag = 'scoped memory for tpu_custom_call.1']
    #allocation10 [shape = 'u8[131072]{0}', space=vmem, size = 0x20000, scoped, tag = 'input window, operand 7']
    #allocation11 [shape = 'u8[131072]{0}', space=vmem, size = 0x20000, scoped, tag = 'output window, operand 0']
    %13 = vsyncpa [#allocation3], 0
    %s14 = scalar_lea.sflag [#allocation3], 1
    %15 = vsyncpa %s14, 0
    %16 = vsyncpa [#allocation6], 0
    %17 = vsyncpa [#allocation9], 0
    %18 = vsyncpa [#allocation4], 0
    %s19 = scalar_lea.sflag [#allocation4], 1
    %20 = vsyncpa %s19, 0
    loop: start=0, step=1, limit=5
    $region2: #{tpu_custom_call.1} parent=1 // loop_pre_header
      _
    $region3: #{tpu_custom_call.1} parent=1 // loop_header
      %s22 = sphi 0, %s26
      %p23 = scmp.ge.s32.totalorder %s22, 5
      %s32 = sphi 0, %s34
      %s35 = sphi 0, %s32
      %s36 = sphi 0, %s35
      %s52 = sphi 0, %s36
      %s56 = sphi 0, %s56
      %s58 = sphi 0, %s56
      %s59 = sphi 0, %s58
      %s73 = sphi 0, %s59
      %s77 = sphi 0, %s77
      %s79 = sphi 0, %s77
      %s80 = sphi 0, %s79
      %s94 = sphi 0, %s80
      %s98 = sphi 0, %s98
      %s100 = sphi 0, %s98
      %s101 = sphi 0, %s100
      %s115 = sphi 0, %s101
      %s119 = sphi 0, %s119
      %s121 = sphi 0, %s119
      %s122 = sphi 0, %s121
      %s136 = sphi 0, %s122
      %s140 = sphi 0, %s140
      %s142 = sphi 0, %s140
      %s143 = sphi 0, %s142
      %s157 = sphi 0, %s143
      %s161 = sphi 0, %s161
      %s163 = sphi 0, %s161
      %s164 = sphi 0, %s163
      %s178 = sphi 0, %s164
      %s184 = sphi 0, %s186
      %s187 = sphi 0, %s184
      %s188 = sphi 0, %s187
      %s204 = sphi 0, %s188
      %s210 = sphi 0, %s212
      %s213 = sphi 0, %s210
      %s214 = sphi 0, %s213
      %s230 = sphi 0, %s214
    $region4: #{tpu_custom_call.1} parent=1 // loop_header_branch
      %25 = sbr.rel (%p23) target = $region8
    $region5: #{tpu_custom_call.1} parent=1 // loop_body
      %s27 = ssub.s32 %s22, 1
      %s28 = ssub.s32 %s22, 2
      %s29 = sadd.s32 %s22, 1
      %s30 = ssub.s32 %s22, %s29
      %p31 = scmp.eq.s32.totalorder %s30, 0
      %s33 = sadd.s32 %s32, 1
      %s34 = scalar_select %p31, %s32, %s33
      %p37 = pneg %p31
      %p38 = scmp.eq.s32.totalorder %s22, 2
      %p39 = por %p37, %p38
      %p40 = scmp.ne.s32.totalorder %s32, %s35
      %p41 = scmp.eq.s32.totalorder %s22, 0
      %p42 = por %p40, %p41
      %p43 = scmp.ne.s32.totalorder %s32, %s35
      %p44 = scmp.eq.s32.totalorder %s27, 2
      %p45 = por %p43, %p44
      %p46 = scmp.ne.s32.totalorder %s35, %s36
      %p47 = scmp.eq.s32.totalorder %s27, 0
      %p48 = por %p46, %p47
      %p49 = scmp.ne.s32.totalorder %s35, %s36
      %p50 = scmp.eq.s32.totalorder %s28, 2
      %p51 = por %p49, %p50
      %p53 = scmp.ne.s32.totalorder %s36, %s52
      %p54 = scmp.eq.s32.totalorder %s28, 0
      %p55 = por %p53, %p54
      %s57 = sadd.s32 %s56, 1
      %p60 = scmp.eq.s32.totalorder %s22, 2
      %p61 = scmp.ne.s32.totalorder %s56, %s58
      %p62 = scmp.eq.s32.totalorder %s22, 0
      %p63 = por %p61, %p62
      %p64 = scmp.ne.s32.totalorder %s56, %s58
      %p65 = scmp.eq.s32.totalorder %s27, 2
      %p66 = por %p64, %p65
      %p67 = scmp.ne.s32.totalorder %s58, %s59
      %p68 = scmp.eq.s32.totalorder %s27, 0
      %p69 = por %p67, %p68
      %p70 = scmp.ne.s32.totalorder %s58, %s59
      %p71 = scmp.eq.s32.totalorder %s28, 2
      %p72 = por %p70, %p71
      %p74 = scmp.ne.s32.totalorder %s59, %s73
      %p75 = scmp.eq.s32.totalorder %s28, 0
      %p76 = por %p74, %p75
      %s78 = sadd.s32 %s77, 1
      %p81 = scmp.eq.s32.totalorder %s22, 2
      %p82 = scmp.ne.s32.totalorder %s77, %s79
      %p83 = scmp.eq.s32.totalorder %s22, 0
      %p84 = por %p82, %p83
      %p85 = scmp.ne.s32.totalorder %s77, %s79
      %p86 = scmp.eq.s32.totalorder %s27, 2
      %p87 = por %p85, %p86
      %p88 = scmp.ne.s32.totalorder %s79, %s80
      %p89 = scmp.eq.s32.totalorder %s27, 0
      %p90 = por %p88, %p89
      %p91 = scmp.ne.s32.totalorder %s79, %s80
      %p92 = scmp.eq.s32.totalorder %s28, 2
      %p93 = por %p91, %p92
      %p95 = scmp.ne.s32.totalorder %s80, %s94
      %p96 = scmp.eq.s32.totalorder %s28, 0
      %p97 = por %p95, %p96
      %s99 = sadd.s32 %s98, 1
      %p102 = scmp.eq.s32.totalorder %s22, 2
      %p103 = scmp.ne.s32.totalorder %s98, %s100
      %p104 = scmp.eq.s32.totalorder %s22, 0
      %p105 = por %p103, %p104
      %p106 = scmp.ne.s32.totalorder %s98, %s100
      %p107 = scmp.eq.s32.totalorder %s27, 2
      %p108 = por %p106, %p107
      %p109 = scmp.ne.s32.totalorder %s100, %s101
      %p110 = scmp.eq.s32.totalorder %s27, 0
      %p111 = por %p109, %p110
      %p112 = scmp.ne.s32.totalorder %s100, %s101
      %p113 = scmp.eq.s32.totalorder %s28, 2
      %p114 = por %p112, %p113
      %p116 = scmp.ne.s32.totalorder %s101, %s115
      %p117 = scmp.eq.s32.totalorder %s28, 0
      %p118 = por %p116, %p117
      %s120 = sadd.s32 %s119, 1
      %p123 = scmp.eq.s32.totalorder %s22, 2
      %p124 = scmp.ne.s32.totalorder %s119, %s121
      %p125 = scmp.eq.s32.totalorder %s22, 0
      %p126 = por %p124, %p125
      %p127 = scmp.ne.s32.totalorder %s119, %s121
      %p128 = scmp.eq.s32.totalorder %s27, 2
      %p129 = por %p127, %p128
      %p130 = scmp.ne.s32.totalorder %s121, %s122
      %p131 = scmp.eq.s32.totalorder %s27, 0
      %p132 = por %p130, %p131
      %p133 = scmp.ne.s32.totalorder %s121, %s122
      %p134 = scmp.eq.s32.totalorder %s28, 2
      %p135 = por %p133, %p134
      %p137 = scmp.ne.s32.totalorder %s122, %s136
      %p138 = scmp.eq.s32.totalorder %s28, 0
      %p139 = por %p137, %p138
      %s141 = sadd.s32 %s140, 1
      %p144 = scmp.eq.s32.totalorder %s22, 2
      %p145 = scmp.ne.s32.totalorder %s140, %s142
      %p146 = scmp.eq.s32.totalorder %s22, 0
      %p147 = por %p145, %p146
      %p148 = scmp.ne.s32.totalorder %s140, %s142
      %p149 = scmp.eq.s32.totalorder %s27, 2
      %p150 = por %p148, %p149
      %p151 = scmp.ne.s32.totalorder %s142, %s143
      %p152 = scmp.eq.s32.totalorder %s27, 0
      %p153 = por %p151, %p152
      %p154 = scmp.ne.s32.totalorder %s142, %s143
      %p155 = scmp.eq.s32.totalorder %s28, 2
      %p156 = por %p154, %p155
      %p158 = scmp.ne.s32.totalorder %s143, %s157
      %p159 = scmp.eq.s32.totalorder %s28, 0
      %p160 = por %p158, %p159
      %s162 = sadd.s32 %s161, 1
      %p165 = scmp.eq.s32.totalorder %s22, 2
      %p166 = scmp.ne.s32.totalorder %s161, %s163
      %p167 = scmp.eq.s32.totalorder %s22, 0
      %p168 = por %p166, %p167
      %p169 = scmp.ne.s32.totalorder %s161, %s163
      %p170 = scmp.eq.s32.totalorder %s27, 2
      %p171 = por %p169, %p170
      %p172 = scmp.ne.s32.totalorder %s163, %s164
      %p173 = scmp.eq.s32.totalorder %s27, 0
      %p174 = por %p172, %p173
      %p175 = scmp.ne.s32.totalorder %s163, %s164
      %p176 = scmp.eq.s32.totalorder %s28, 2
      %p177 = por %p175, %p176
      %p179 = scmp.ne.s32.totalorder %s164, %s178
      %p180 = scmp.eq.s32.totalorder %s28, 0
      %p181 = por %p179, %p180
      %s182 = ssub.s32 %s22, %s29
      %p183 = scmp.eq.s32.totalorder %s182, 0
      %s185 = sadd.s32 %s184, 1
      %s186 = scalar_select %p183, %s184, %s185
      %p189 = pneg %p183
      %p190 = scmp.eq.s32.totalorder %s22, 2
      %p191 = por %p189, %p190
      %p192 = scmp.ne.s32.totalorder %s184, %s187
      %p193 = scmp.eq.s32.totalorder %s22, 0
      %p194 = por %p192, %p193
      %p195 = scmp.ne.s32.totalorder %s184, %s187
      %p196 = scmp.eq.s32.totalorder %s27, 2
      %p197 = por %p195, %p196
      %p198 = scmp.ne.s32.totalorder %s187, %s188
      %p199 = scmp.eq.s32.totalorder %s27, 0
      %p200 = por %p198, %p199
      %p201 = scmp.ne.s32.totalorder %s187, %s188
      %p202 = scmp.eq.s32.totalorder %s28, 2
      %p203 = por %p201, %p202
      %p205 = scmp.ne.s32.totalorder %s188, %s204
      %p206 = scmp.eq.s32.totalorder %s28, 0
      %p207 = por %p205, %p206
      %s208 = ssub.s32 %s22, %s29
      %p209 = scmp.eq.s32.totalorder %s208, 0
      %s211 = sadd.s32 %s210, 1
      %s212 = scalar_select %p209, %s210, %s211
      %p215 = pneg %p209
      %p216 = scmp.eq.s32.totalorder %s22, 2
      %p217 = por %p215, %p216
      %p218 = scmp.ne.s32.totalorder %s210, %s213
      %p219 = scmp.eq.s32.totalorder %s22, 0
      %p220 = por %p218, %p219
      %p221 = scmp.ne.s32.totalorder %s210, %s213
      %p222 = scmp.eq.s32.totalorder %s27, 2
      %p223 = por %p221, %p222
      %p224 = scmp.ne.s32.totalorder %s213, %s214
      %p225 = scmp.eq.s32.totalorder %s27, 0
      %p226 = por %p224, %p225
      %p227 = scmp.ne.s32.totalorder %s213, %s214
      %p228 = scmp.eq.s32.totalorder %s28, 2
      %p229 = por %p227, %p228
      %p231 = scmp.ne.s32.totalorder %s214, %s230
      %p232 = scmp.eq.s32.totalorder %s28, 0
      %p233 = por %p231, %p232
      %p234 = scmp.le.s32.totalorder 1, %s22
      %p235 = scmp.lt.s32.totalorder %s22, 4
      %p236 = pnand %p234, %p235
      %p237 = pneg %p236
      // Predicated region
      $region9: #{tpu_custom_call.1} parent=5 // pred_check
        _
      $region10: #{tpu_custom_call.1} parent=5 // pred_check_branch
        %239 = sbr.rel (%p236) target = $region12
      $region11: #{tpu_custom_call.1} parent=5 // pred_region
        %s240 = ssub.s32 %s22, 1
        // Predicated region
        $region13: #{tpu_custom_call.1} parent=11 // pred_check
          %p241 = pneg %p69
        $region14: #{tpu_custom_call.1} parent=11 // pred_check_branch
          %243 = sbr.rel (%p241) target = $region16
        $region15: #{tpu_custom_call.1} parent=11 // pred_region
          %s245 = ssub.s32 2048, 2048
          %246 = vsyncadd [#allocation6], %s245
          %s247 = sshll.u32 [#allocation5], 4
          %s248 = int_to_ptr.vmem [resolvable:$true] %s247
          %253 = dma.hbm_to_vmem [thread:$0]  %s1, 2048, %s248, [#allocation6], 128, 128, 8
        $region16: #{tpu_custom_call.1} parent=11 // pred_fallthru
          _
        // Predicated region
        $region17: #{tpu_custom_call.1} parent=11 // pred_check
          %p254 = pneg %p90
        $region18: #{tpu_custom_call.1} parent=11 // pred_check_branch
          %256 = sbr.rel (%p254) target = $region20
        $region19: #{tpu_custom_call.1} parent=11 // pred_region
          _
        $region20: #{tpu_custom_call.1} parent=11 // pred_fallthru
          _
        // Predicated region
        $region21: #{tpu_custom_call.1} parent=11 // pred_check
          %p257 = pneg %p111
        $region22: #{tpu_custom_call.1} parent=11 // pred_check_branch
          %259 = sbr.rel (%p257) target = $region24
        $region23: #{tpu_custom_call.1} parent=11 // pred_region
          %s261 = ssub.s32 2048, 2048
          %262 = vsyncadd [#allocation6], %s261
          %s263 = sshll.u32 [#allocation7], 4
          %s264 = int_to_ptr.vmem [resolvable:$true] %s263
          %269 = dma.hbm_to_vmem [thread:$0]  %s3, 2048, %s264, [#allocation6], 128, 128, 8
        $region24: #{tpu_custom_call.1} parent=11 // pred_fallthru
          _
        // Predicated region
        $region25: #{tpu_custom_call.1} parent=11 // pred_check
          %p270 = pneg %p132
        $region26: #{tpu_custom_call.1} parent=11 // pred_check_branch
          %272 = sbr.rel (%p270) target = $region28
        $region27: #{tpu_custom_call.1} parent=11 // pred_region
          _
        $region28: #{tpu_custom_call.1} parent=11 // pred_fallthru
          _
        // Predicated region
        $region29: #{tpu_custom_call.1} parent=11 // pred_check
          %p273 = pneg %p153
        $region30: #{tpu_custom_call.1} parent=11 // pred_check_branch
          %275 = sbr.rel (%p273) target = $region32
        $region31: #{tpu_custom_call.1} parent=11 // pred_region
          %s277 = ssub.s32 2048, 2048
          %278 = vsyncadd [#allocation9], %s277
          %s279 = sshll.u32 [#allocation8], 4
          %s280 = int_to_ptr.vmem [resolvable:$true] %s279
          %285 = dma.hbm_to_vmem [thread:$0]  %s5, 2048, %s280, [#allocation9], 128, 128, 8
        $region32: #{tpu_custom_call.1} parent=11 // pred_fallthru
          _
        // Predicated region
        $region33: #{tpu_custom_call.1} parent=11 // pred_check
          %p286 = pneg %p174
        $region34: #{tpu_custom_call.1} parent=11 // pred_check_branch
          %288 = sbr.rel (%p286) target = $region36
        $region35: #{tpu_custom_call.1} parent=11 // pred_region
          _
        $region36: #{tpu_custom_call.1} parent=11 // pred_fallthru
          _
      $region12: #{tpu_custom_call.1} parent=5 // pred_fallthru
        _
      %p289 = scmp.lt.s32.totalorder %s22, 3
      // Predicated region
      $region37: #{tpu_custom_call.1} parent=5 // pred_check
        %p290 = pneg %p289
      $region38: #{tpu_custom_call.1} parent=5 // pred_check_branch
        %292 = sbr.rel (%p290) target = $region40
      $region39: #{tpu_custom_call.1} parent=5 // pred_region
        // Predicated region
        $region41: #{tpu_custom_call.1} parent=39 // pred_check
          %p293 = pneg %p42
        $region42: #{tpu_custom_call.1} parent=39 // pred_check_branch
          %295 = sbr.rel (%p293) target = $region44
        $region43: #{tpu_custom_call.1} parent=39 // pred_region
          %s296 = sand.u32 %s22, 1
          %s297 = scalar_lea.sflag [#allocation3], %s296
          %s298 = sand.u32 %s32, 1
          %s299 = smul.addr %s298, 128
          %s300 = scalar_lea.vmem [#allocation2], %s299
          %s301 = smul.u32 16, %s22
          %s303 = ssub.s32 2048, 2048
          %304 = vsyncadd %s297, %s303
          %s305 = smul.addr %s301, 128
          %s306 = scalar_lea.hbm %s0, %s305
          %s307 = sshll.u32 %s300, 4
          %s308 = int_to_ptr.vmem [resolvable:$true] %s307
          %313 = dma.hbm_to_vmem [thread:$0]  %s306, 2048, %s308, %s297, 128, 128, 8
        $region44: #{tpu_custom_call.1} parent=39 // pred_fallthru
          _
        // Predicated region
        $region45: #{tpu_custom_call.1} parent=39 // pred_check
          %p314 = pneg %p194
        $region46: #{tpu_custom_call.1} parent=39 // pred_check_branch
          %316 = sbr.rel (%p314) target = $region48
        $region47: #{tpu_custom_call.1} parent=39 // pred_region
          %s317 = sand.u32 %s22, 1
          %s318 = scalar_lea.sflag [#allocation3], %s317
          %s319 = sand.u32 %s184, 1
          %s320 = smul.addr %s319, 128
          %s321 = scalar_lea.vmem [#allocation10], %s320
          %s322 = smul.u32 16, %s22
          %s324 = ssub.s32 2048, 2048
          %325 = vsyncadd %s318, %s324
          %s326 = smul.addr %s322, 128
          %s327 = scalar_lea.hbm %s7, %s326
          %s328 = sshll.u32 %s321, 4
          %s329 = int_to_ptr.vmem [resolvable:$true] %s328
          %334 = dma.hbm_to_vmem [thread:$0]  %s327, 2048, %s329, %s318, 128, 128, 8
        $region48: #{tpu_custom_call.1} parent=39 // pred_fallthru
          _
      $region40: #{tpu_custom_call.1} parent=5 // pred_fallthru
        _
      %p335 = scmp.le.s32.totalorder 1, %s22
      %p336 = scmp.lt.s32.totalorder %s22, 4
      %p337 = pnand %p335, %p336
      %p338 = pneg %p337
      // Predicated region
      $region49: #{tpu_custom_call.1} parent=5 // pred_check
        _
      $region50: #{tpu_custom_call.1} parent=5 // pred_check_branch
        %340 = sbr.rel (%p337) target = $region52
      $region51: #{tpu_custom_call.1} parent=5 // pred_region
        %s341 = ssub.s32 %s22, 1
        %s342 = sand.u32 %s27, 1
        %s343 = scalar_lea.sflag [#allocation3], %s342
        %s344 = sand.u32 %s35, 1
        %s345 = smul.addr %s344, 128
        %s346 = scalar_lea.vmem [#allocation2], %s345
        // Predicated region
        $region53: #{tpu_custom_call.1} parent=51 // pred_check
          %p347 = pneg %p48
        $region54: #{tpu_custom_call.1} parent=51 // pred_check_branch
          %349 = sbr.rel (%p347) target = $region56
        $region55: #{tpu_custom_call.1} parent=51 // pred_region
          %350 = dma.done %s343, 2048
        $region56: #{tpu_custom_call.1} parent=51 // pred_fallthru
          _
        // Predicated region
        $region57: #{tpu_custom_call.1} parent=51 // pred_check
          %p351 = pneg %p69
        $region58: #{tpu_custom_call.1} parent=51 // pred_check_branch
          %353 = sbr.rel (%p351) target = $region60
        $region59: #{tpu_custom_call.1} parent=51 // pred_region
          %354 = dma.done [#allocation6], 2048
        $region60: #{tpu_custom_call.1} parent=51 // pred_fallthru
          _
        // Predicated region
        $region61: #{tpu_custom_call.1} parent=51 // pred_check
          %p355 = pneg %p111
        $region62: #{tpu_custom_call.1} parent=51 // pred_check_branch
          %357 = sbr.rel (%p355) target = $region64
        $region63: #{tpu_custom_call.1} parent=51 // pred_region
          %358 = dma.done [#allocation6], 2048
        $region64: #{tpu_custom_call.1} parent=51 // pred_fallthru
          _
        // Predicated region
        $region65: #{tpu_custom_call.1} parent=51 // pred_check
          %p359 = pneg %p153
        $region66: #{tpu_custom_call.1} parent=51 // pred_check_branch
          %361 = sbr.rel (%p359) target = $region68
        $region67: #{tpu_custom_call.1} parent=51 // pred_region
          %362 = dma.done [#allocation9], 2048
        $region68: #{tpu_custom_call.1} parent=51 // pred_fallthru
          _
        %s363 = sand.u32 %s27, 1
        %s364 = scalar_lea.sflag [#allocation3], %s363
        %s365 = sand.u32 %s187, 1
        %s366 = smul.addr %s365, 128
        %s367 = scalar_lea.vmem [#allocation10], %s366
        // Predicated region
        $region69: #{tpu_custom_call.1} parent=51 // pred_check
          %p368 = pneg %p200
        $region70: #{tpu_custom_call.1} parent=51 // pred_check_branch
          %370 = sbr.rel (%p368) target = $region72
        $region71: #{tpu_custom_call.1} parent=51 // pred_region
          %371 = dma.done %s364, 2048
        $region72: #{tpu_custom_call.1} parent=51 // pred_fallthru
          _
        %s372 = sand.u32 %s27, 1
        %s373 = scalar_lea.sflag [#allocation3], %s372
        %s374 = sand.u32 %s35, 1
        %s375 = smul.addr %s374, 128
        %s376 = scalar_lea.vmem [#allocation2], %s375
        %p377 = pneg %p48
        %p378 = pneg %p45
        %p379 = pneg %p69
        %p380 = pneg %p66
        %p381 = pneg %p90
        %p382 = pneg %p87
        %p383 = pneg %p111
        %p384 = pneg %p108
        %p385 = pneg %p132
        %p386 = pneg %p129
        %p387 = pneg %p153
        %p388 = pneg %p150
        %p389 = pneg %p174
        %p390 = pneg %p171
        %s391 = sand.u32 %s27, 1
        %s392 = scalar_lea.sflag [#allocation3], %s391
        %s393 = sand.u32 %s187, 1
        %s394 = smul.addr %s393, 128
        %s395 = scalar_lea.vmem [#allocation10], %s394
        %p396 = pneg %p200
        %p397 = pneg %p197
        %p398 = pneg %p226
        %p399 = pneg %p223
        %s400 = sand.u32 %s213, 1
        %s401 = scalar_lea.sflag [#allocation4], %s400
        %s402 = sand.u32 %s213, 1
        %s403 = smul.addr %s402, 128
        %s404 = scalar_lea.vmem [#allocation11], %s403
        %s405 = smul.u32 16, %s27
        %s406 = smul.u32 16, %s27
        %s407 = smul.u32 16, %s27
        %v408 = vld [vmem:[%s346] sm:$0xff]
        %v409 = vld [vmem:[%s346 + $0x8] sm:$0xff]
        %v410 = vld [vmem:[%s346 + $0x10] sm:$0xff]
        %v411 = vld [vmem:[%s346 + $0x18] sm:$0xff]
        %v412 = vld [vmem:[%s346 + $0x20] sm:$0xff]
        %v413 = vld [vmem:[%s346 + $0x28] sm:$0xff]
        %v414 = vld [vmem:[%s346 + $0x30] sm:$0xff]
        %v415 = vld [vmem:[%s346 + $0x38] sm:$0xff]
        %v416 = vld [vmem:[%s346 + $0x40] sm:$0xff]
        %v417 = vld [vmem:[%s346 + $0x48] sm:$0xff]
        %v418 = vld [vmem:[%s346 + $0x50] sm:$0xff]
        %v419 = vld [vmem:[%s346 + $0x58] sm:$0xff]
        %v420 = vld [vmem:[%s346 + $0x60] sm:$0xff]
        %v421 = vld [vmem:[%s346 + $0x68] sm:$0xff]
        %v422 = vld [vmem:[%s346 + $0x70] sm:$0xff]
        %v423 = vld [vmem:[%s346 + $0x78] sm:$0xff]
        %v424 = vld [vmem:[#allocation5] sm:$0xff]
        %v425 = vld [vmem:[#allocation5 + $0x8] sm:$0xff]
        %v426 = vld [vmem:[#allocation5 + $0x10] sm:$0xff]
        %v427 = vld [vmem:[#allocation5 + $0x18] sm:$0xff]
        %v428 = vld [vmem:[#allocation5 + $0x20] sm:$0xff]
        %v429 = vld [vmem:[#allocation5 + $0x28] sm:$0xff]
        %v430 = vld [vmem:[#allocation5 + $0x30] sm:$0xff]
        %v431 = vld [vmem:[#allocation5 + $0x38] sm:$0xff]
        %v432 = vld [vmem:[#allocation5 + $0x40] sm:$0xff]
        %v433 = vld [vmem:[#allocation5 + $0x48] sm:$0xff]
        %v434 = vld [vmem:[#allocation5 + $0x50] sm:$0xff]
        %v435 = vld [vmem:[#allocation5 + $0x58] sm:$0xff]
        %v436 = vld [vmem:[#allocation5 + $0x60] sm:$0xff]
        %v437 = vld [vmem:[#allocation5 + $0x68] sm:$0xff]
        %v438 = vld [vmem:[#allocation5 + $0x70] sm:$0xff]
        %v439 = vld [vmem:[#allocation5 + $0x78] sm:$0xff]
        %v440 = vld [vmem:[%s2] sm:$0x1]
        %v442 = vlaneseq
        %v443 = vshrl.u32 %v442, 7
        %v444 = vsub.s32 0, %v443
        %v445 = vrot.slane %v440, %v444
        %447 = vmatprep.subr.mxu0 0.0
        %448 = vmatpush1.msra.mxu0 %v424
        %449 = vmatprep.subr.mxu0 0.0
        %450 = vmatpush1.msra.mxu0 %v425
        %451 = vmatprep.subr.mxu0 0.0
        %452 = vmatpush1.msra.mxu0 %v426
        %453 = vmatprep.subr.mxu0 0.0
        %454 = vmatpush1.msra.mxu0 %v427
        %455 = vmatprep.subr.mxu0 0.0
        %456 = vmatpush1.msra.mxu0 %v428
        %457 = vmatprep.subr.mxu0 0.0
        %458 = vmatpush1.msra.mxu0 %v429
        %459 = vmatprep.subr.mxu0 0.0
        %460 = vmatpush1.msra.mxu0 %v430
        %461 = vmatprep.subr.mxu0 0.0
        %462 = vmatpush1.msra.mxu0 %v431
        %463 = vmatprep.subr.mxu0 0.0
        %464 = vmatpush1.msra.mxu0 %v432
        %465 = vmatprep.subr.mxu0 0.0
        %466 = vmatpush1.msra.mxu0 %v433
        %467 = vmatprep.subr.mxu0 0.0
        %468 = vmatpush1.msra.mxu0 %v434
        %469 = vmatprep.subr.mxu0 0.0
        %470 = vmatpush1.msra.mxu0 %v435
        %471 = vmatprep.subr.mxu0 0.0
        %472 = vmatpush1.msra.mxu0 %v436
        %473 = vmatprep.subr.mxu0 0.0
        %474 = vmatpush1.msra.mxu0 %v437
        %475 = vmatprep.subr.mxu0 0.0
        %476 = vmatpush1.msra.mxu0 %v438
        %477 = vmatprep.subr.mxu0 0.0
        %478 = vmatpush1.msra.mxu0 %v439
        %479 = vmatprep.subr.mxu0 0.0
        %480 = vmatpush1.msra.mxu0 0.0
        %481 = vmatprep.subr.mxu0 0.0
        %482 = vmatpush1.msra.mxu0 0.0
        %483 = vmatprep.subr.mxu0 0.0
        %484 = vmatpush1.msra.mxu0 0.0
        %485 = vmatprep.subr.mxu0 0.0
        %486 = vmatpush1.msra.mxu0 0.0
        %487 = vmatprep.subr.mxu0 0.0
        %488 = vmatpush1.msra.mxu0 0.0
        %489 = vmatprep.subr.mxu0 0.0
        %490 = vmatpush1.msra.mxu0 0.0
        %491 = vmatprep.subr.mxu0 0.0
        %492 = vmatpush1.msra.mxu0 0.0
        %493 = vmatprep.subr.mxu0 0.0
        %494 = vmatpush1.msra.mxu0 0.0
        %495 = vmatprep.subr.mxu0 0.0
        %496 = vmatpush1.msra.mxu0 0.0
        %497 = vmatprep.subr.mxu0 0.0
        %498 = vmatpush1.msra.mxu0 0.0
        %499 = vmatprep.subr.mxu0 0.0
        %500 = vmatpush1.msra.mxu0 0.0
        %501 = vmatprep.subr.mxu0 0.0
        %502 = vmatpush1.msra.mxu0 0.0
        %503 = vmatprep.subr.mxu0 0.0
        %504 = vmatpush1.msra.mxu0 0.0
        %505 = vmatprep.subr.mxu0 0.0
        %506 = vmatpush1.msra.mxu0 0.0
        %507 = vmatprep.subr.mxu0 0.0
        %508 = vmatpush1.msra.mxu0 0.0
        %509 = vmatprep.subr.mxu0 0.0
        %510 = vmatpush1.msra.mxu0 0.0
        %511 = vmatprep.mubr.f32.mxu0 0.0
        %512 = vmatmul.mubr.f32.gmra.mrb[0].mxu0 %v408
        %v513 = vpop.f32.mrb[0].mxu0
        %v514 = vadd.f32 %v445, %v513
        %v515 = vpop.f32.mrb[0].mxu0
        %516 = vmatprep.mubr.f32.mxu0 0.0
        %517 = vmatmul.mubr.f32.gmra.mrb[0].mxu0 %v409
        %v518 = vpop.f32.mrb[0].mxu0
        %v519 = vadd.f32 %v445, %v518
        %v520 = vpop.f32.mrb[0].mxu0
        %521 = vmatprep.mubr.f32.mxu0 0.0
        %522 = vmatmul.mubr.f32.gmra.mrb[0].mxu0 %v410
        %v523 = vpop.f32.mrb[0].mxu0
        %v524 = vadd.f32 %v445, %v523
        %v525 = vpop.f32.mrb[0].mxu0
        %526 = vmatprep.mubr.f32.mxu0 0.0
        %527 = vmatmul.mubr.f32.gmra.mrb[0].mxu0 %v411
        %v528 = vpop.f32.mrb[0].mxu0
        %v529 = vadd.f32 %v445, %v528
        %v530 = vpop.f32.mrb[0].mxu0
        %531 = vmatprep.mubr.f32.mxu0 0.0
        %532 = vmatmul.mubr.f32.gmra.mrb[0].mxu0 %v412
        %v533 = vpop.f32.mrb[0].mxu0
        %v534 = vadd.f32 %v445, %v533
        %v535 = vpop.f32.mrb[0].mxu0
        %536 = vmatprep.mubr.f32.mxu0 0.0
        %537 = vmatmul.mubr.f32.gmra.mrb[0].mxu0 %v413
        %v538 = vpop.f32.mrb[0].mxu0
        %v539 = vadd.f32 %v445, %v538
        %v540 = vpop.f32.mrb[0].mxu0
        %541 = vmatprep.mubr.f32.mxu0 0.0
        %542 = vmatmul.mubr.f32.gmra.mrb[0].mxu0 %v414
        %v543 = vpop.f32.mrb[0].mxu0
        %v544 = vadd.f32 %v445, %v543
        %v545 = vpop.f32.mrb[0].mxu0
        %546 = vmatprep.mubr.f32.mxu0 0.0
        %547 = vmatmul.mubr.f32.gmra.mrb[0].mxu0 %v415
        %v548 = vpop.f32.mrb[0].mxu0
        %v549 = vadd.f32 %v445, %v548
        %v550 = vpop.f32.mrb[0].mxu0
        %551 = vmatprep.mubr.f32.mxu0 0.0
        %552 = vmatmul.mubr.f32.gmra.mrb[0].mxu0 %v416
        %v553 = vpop.f32.mrb[0].mxu0
        %v554 = vadd.f32 %v445, %v553
        %v555 = vpop.f32.mrb[0].mxu0
        %556 = vmatprep.mubr.f32.mxu0 0.0
        %557 = vmatmul.mubr.f32.gmra.mrb[0].mxu0 %v417
        %v558 = vpop.f32.mrb[0].mxu0
        %v559 = vadd.f32 %v445, %v558
        %v560 = vpop.f32.mrb[0].mxu0
        %561 = vmatprep.mubr.f32.mxu0 0.0
        %562 = vmatmul.mubr.f32.gmra.mrb[0].mxu0 %v418
        %v563 = vpop.f32.mrb[0].mxu0
        %v564 = vadd.f32 %v445, %v563
        %v565 = vpop.f32.mrb[0].mxu0
        %566 = vmatprep.mubr.f32.mxu0 0.0
        %567 = vmatmul.mubr.f32.gmra.mrb[0].mxu0 %v419
        %v568 = vpop.f32.mrb[0].mxu0
        %v569 = vadd.f32 %v445, %v568
        %v570 = vpop.f32.mrb[0].mxu0
        %571 = vmatprep.mubr.f32.mxu0 0.0
        %572 = vmatmul.mubr.f32.gmra.mrb[0].mxu0 %v420
        %v573 = vpop.f32.mrb[0].mxu0
        %v574 = vadd.f32 %v445, %v573
        %v575 = vpop.f32.mrb[0].mxu0
        %576 = vmatprep.mubr.f32.mxu0 0.0
        %577 = vmatmul.mubr.f32.gmra.mrb[0].mxu0 %v421
        %v578 = vpop.f32.mrb[0].mxu0
        %v579 = vadd.f32 %v445, %v578
        %v580 = vpop.f32.mrb[0].mxu0
        %581 = vmatprep.mubr.f32.mxu0 0.0
        %582 = vmatmul.mubr.f32.gmra.mrb[0].mxu0 %v422
        %v583 = vpop.f32.mrb[0].mxu0
        %v584 = vadd.f32 %v445, %v583
        %v585 = vpop.f32.mrb[0].mxu0
        %586 = vmatprep.mubr.f32.mxu0 0.0
        %587 = vmatmul.mubr.f32.gmra.mrb[0].mxu0 %v423
        %v588 = vpop.f32.mrb[0].mxu0
        %v589 = vadd.f32 %v445, %v588
        %v590 = vpop.f32.mrb[0].mxu0
        %591 = vdwg.mxu0
        %v592 = vmax.f32 %v514, 0.0
        %v593 = vmax.f32 %v519, 0.0
        %v594 = vmax.f32 %v524, 0.0
        %v595 = vmax.f32 %v529, 0.0
        %v596 = vmax.f32 %v534, 0.0
        %v597 = vmax.f32 %v539, 0.0
        %v598 = vmax.f32 %v544, 0.0
        %v599 = vmax.f32 %v549, 0.0
        %v600 = vmax.f32 %v554, 0.0
        %v601 = vmax.f32 %v559, 0.0
        %v602 = vmax.f32 %v564, 0.0
        %v603 = vmax.f32 %v569, 0.0
        %v604 = vmax.f32 %v574, 0.0
        %v605 = vmax.f32 %v579, 0.0
        %v606 = vmax.f32 %v584, 0.0
        %v607 = vmax.f32 %v589, 0.0
        %v608 = vld [vmem:[#allocation7] sm:$0xff]
        %v609 = vld [vmem:[#allocation7 + $0x8] sm:$0xff]
        %v610 = vld [vmem:[#allocation7 + $0x10] sm:$0xff]
        %v611 = vld [vmem:[#allocation7 + $0x18] sm:$0xff]
        %v612 = vld [vmem:[#allocation7 + $0x20] sm:$0xff]
        %v613 = vld [vmem:[#allocation7 + $0x28] sm:$0xff]
        %v614 = vld [vmem:[#allocation7 + $0x30] sm:$0xff]
        %v615 = vld [vmem:[#allocation7 + $0x38] sm:$0xff]
        %v616 = vld [vmem:[#allocation7 + $0x40] sm:$0xff]
        %v617 = vld [vmem:[#allocation7 + $0x48] sm:$0xff]
        %v618 = vld [vmem:[#allocation7 + $0x50] sm:$0xff]
        %v619 = vld [vmem:[#allocation7 + $0x58] sm:$0xff]
        %v620 = vld [vmem:[#allocation7 + $0x60] sm:$0xff]
        %v621 = vld [vmem:[#allocation7 + $0x68] sm:$0xff]
        %v622 = vld [vmem:[#allocation7 + $0x70] sm:$0xff]
        %v623 = vld [vmem:[#allocation7 + $0x78] sm:$0xff]
        %v624 = vld [vmem:[%s4] sm:$0x1]
        %v626 = vlaneseq
        %v627 = vshrl.u32 %v626, 7
        %v628 = vsub.s32 0, %v627
        %v629 = vrot.slane %v624, %v628
        %631 = vmatprep.subr.mxu0 0.0
        %632 = vmatpush1.msra.mxu0 %v608
        %633 = vmatprep.subr.mxu0 0.0
        %634 = vmatpush1.msra.mxu0 %v609
        %635 = vmatprep.subr.mxu0 0.0
        %636 = vmatpush1.msra.mxu0 %v610
        %637 = vmatprep.subr.mxu0 0.0
        %638 = vmatpush1.msra.mxu0 %v611
        %639 = vmatprep.subr.mxu0 0.0
        %640 = vmatpush1.msra.mxu0 %v612
        %641 = vmatprep.subr.mxu0 0.0
        %642 = vmatpush1.msra.mxu0 %v613
        %643 = vmatprep.subr.mxu0 0.0
        %644 = vmatpush1.msra.mxu0 %v614
        %645 = vmatprep.subr.mxu0 0.0
        %646 = vmatpush1.msra.mxu0 %v615
        %647 = vmatprep.subr.mxu0 0.0
        %648 = vmatpush1.msra.mxu0 %v616
        %649 = vmatprep.subr.mxu0 0.0
        %650 = vmatpush1.msra.mxu0 %v617
        %651 = vmatprep.subr.mxu0 0.0
        %652 = vmatpush1.msra.mxu0 %v618
        %653 = vmatprep.subr.mxu0 0.0
        %654 = vmatpush1.msra.mxu0 %v619
        %655 = vmatprep.subr.mxu0 0.0
        %656 = vmatpush1.msra.mxu0 %v620
        %657 = vmatprep.subr.mxu0 0.0
        %658 = vmatpush1.msra.mxu0 %v621
        %659 = vmatprep.subr.mxu0 0.0
        %660 = vmatpush1.msra.mxu0 %v622
        %661 = vmatprep.subr.mxu0 0.0
        %662 = vmatpush1.msra.mxu0 %v623
        %663 = vmatprep.subr.mxu0 0.0
        %664 = vmatpush1.msra.mxu0 0.0
        %665 = vmatprep.subr.mxu0 0.0
        %666 = vmatpush1.msra.mxu0 0.0
        %667 = vmatprep.subr.mxu0 0.0
        %668 = vmatpush1.msra.mxu0 0.0
        %669 = vmatprep.subr.mxu0 0.0
        %670 = vmatpush1.msra.mxu0 0.0
        %671 = vmatprep.subr.mxu0 0.0
        %672 = vmatpush1.msra.mxu0 0.0
        %673 = vmatprep.subr.mxu0 0.0
        %674 = vmatpush1.msra.mxu0 0.0
        %675 = vmatprep.subr.mxu0 0.0
        %676 = vmatpush1.msra.mxu0 0.0
        %677 = vmatprep.subr.mxu0 0.0
        %678 = vmatpush1.msra.mxu0 0.0
        %679 = vmatprep.subr.mxu0 0.0
        %680 = vmatpush1.msra.mxu0 0.0
        %681 = vmatprep.subr.mxu0 0.0
        %682 = vmatpush1.msra.mxu0 0.0
        %683 = vmatprep.subr.mxu0 0.0
        %684 = vmatpush1.msra.mxu0 0.0
        %685 = vmatprep.subr.mxu0 0.0
        %686 = vmatpush1.msra.mxu0 0.0
        %687 = vmatprep.subr.mxu0 0.0
        %688 = vmatpush1.msra.mxu0 0.0
        %689 = vmatprep.subr.mxu0 0.0
        %690 = vmatpush1.msra.mxu0 0.0
        %691 = vmatprep.subr.mxu0 0.0
        %692 = vmatpush1.msra.mxu0 0.0
        %693 = vmatprep.subr.mxu0 0.0
        %694 = vmatpush1.msra.mxu0 0.0
        %695 = vmatprep.mubr.f32.mxu0 0.0
        %696 = vmatmul.mubr.f32.gmra.mrb[0].mxu0 %v592
        %v697 = vpop.f32.mrb[0].mxu0
        %v698 = vadd.f32 %v629, %v697
        %v699 = vpop.f32.mrb[0].mxu0
        %700 = vmatprep.mubr.f32.mxu0 0.0
        %701 = vmatmul.mubr.f32.gmra.mrb[0].mxu0 %v593
        %v702 = vpop.f32.mrb[0].mxu0
        %v703 = vadd.f32 %v629, %v702
        %v704 = vpop.f32.mrb[0].mxu0
        %705 = vmatprep.mubr.f32.mxu0 0.0
        %706 = vmatmul.mubr.f32.gmra.mrb[0].mxu0 %v594
        %v707 = vpop.f32.mrb[0].mxu0
        %v708 = vadd.f32 %v629, %v707
        %v709 = vpop.f32.mrb[0].mxu0
        %710 = vmatprep.mubr.f32.mxu0 0.0
        %711 = vmatmul.mubr.f32.gmra.mrb[0].mxu0 %v595
        %v712 = vpop.f32.mrb[0].mxu0
        %v713 = vadd.f32 %v629, %v712
        %v714 = vpop.f32.mrb[0].mxu0
        %715 = vmatprep.mubr.f32.mxu0 0.0
        %716 = vmatmul.mubr.f32.gmra.mrb[0].mxu0 %v596
        %v717 = vpop.f32.mrb[0].mxu0
        %v718 = vadd.f32 %v629, %v717
        %v719 = vpop.f32.mrb[0].mxu0
        %720 = vmatprep.mubr.f32.mxu0 0.0
        %721 = vmatmul.mubr.f32.gmra.mrb[0].mxu0 %v597
        %v722 = vpop.f32.mrb[0].mxu0
        %v723 = vadd.f32 %v629, %v722
        %v724 = vpop.f32.mrb[0].mxu0
        %725 = vmatprep.mubr.f32.mxu0 0.0
        %726 = vmatmul.mubr.f32.gmra.mrb[0].mxu0 %v598
        %v727 = vpop.f32.mrb[0].mxu0
        %v728 = vadd.f32 %v629, %v727
        %v729 = vpop.f32.mrb[0].mxu0
        %730 = vmatprep.mubr.f32.mxu0 0.0
        %731 = vmatmul.mubr.f32.gmra.mrb[0].mxu0 %v599
        %v732 = vpop.f32.mrb[0].mxu0
        %v733 = vadd.f32 %v629, %v732
        %v734 = vpop.f32.mrb[0].mxu0
        %735 = vmatprep.mubr.f32.mxu0 0.0
        %736 = vmatmul.mubr.f32.gmra.mrb[0].mxu0 %v600
        %v737 = vpop.f32.mrb[0].mxu0
        %v738 = vadd.f32 %v629, %v737
        %v739 = vpop.f32.mrb[0].mxu0
        %740 = vmatprep.mubr.f32.mxu0 0.0
        %741 = vmatmul.mubr.f32.gmra.mrb[0].mxu0 %v601
        %v742 = vpop.f32.mrb[0].mxu0
        %v743 = vadd.f32 %v629, %v742
        %v744 = vpop.f32.mrb[0].mxu0
        %745 = vmatprep.mubr.f32.mxu0 0.0
        %746 = vmatmul.mubr.f32.gmra.mrb[0].mxu0 %v602
        %v747 = vpop.f32.mrb[0].mxu0
        %v748 = vadd.f32 %v629, %v747
        %v749 = vpop.f32.mrb[0].mxu0
        %750 = vmatprep.mubr.f32.mxu0 0.0
        %751 = vmatmul.mubr.f32.gmra.mrb[0].mxu0 %v603
        %v752 = vpop.f32.mrb[0].mxu0
        %v753 = vadd.f32 %v629, %v752
        %v754 = vpop.f32.mrb[0].mxu0
        %755 = vmatprep.mubr.f32.mxu0 0.0
        %756 = vmatmul.mubr.f32.gmra.mrb[0].mxu0 %v604
        %v757 = vpop.f32.mrb[0].mxu0
        %v758 = vadd.f32 %v629, %v757
        %v759 = vpop.f32.mrb[0].mxu0
        %760 = vmatprep.mubr.f32.mxu0 0.0
        %761 = vmatmul.mubr.f32.gmra.mrb[0].mxu0 %v605
        %v762 = vpop.f32.mrb[0].mxu0
        %v763 = vadd.f32 %v629, %v762
        %v764 = vpop.f32.mrb[0].mxu0
        %765 = vmatprep.mubr.f32.mxu0 0.0
        %766 = vmatmul.mubr.f32.gmra.mrb[0].mxu0 %v606
        %v767 = vpop.f32.mrb[0].mxu0
        %v768 = vadd.f32 %v629, %v767
        %v769 = vpop.f32.mrb[0].mxu0
        %770 = vmatprep.mubr.f32.mxu0 0.0
        %771 = vmatmul.mubr.f32.gmra.mrb[0].mxu0 %v607
        %v772 = vpop.f32.mrb[0].mxu0
        %v773 = vadd.f32 %v629, %v772
        %v774 = vpop.f32.mrb[0].mxu0
        %775 = vdwg.mxu0
        %v776 = vmax.f32 %v698, 0.0
        %v777 = vmax.f32 %v703, 0.0
        %v778 = vmax.f32 %v708, 0.0
        %v779 = vmax.f32 %v713, 0.0
        %v780 = vmax.f32 %v718, 0.0
        %v781 = vmax.f32 %v723, 0.0
        %v782 = vmax.f32 %v728, 0.0
        %v783 = vmax.f32 %v733, 0.0
        %v784 = vmax.f32 %v738, 0.0
        %v785 = vmax.f32 %v743, 0.0
        %v786 = vmax.f32 %v748, 0.0
        %v787 = vmax.f32 %v753, 0.0
        %v788 = vmax.f32 %v758, 0.0
        %v789 = vmax.f32 %v763, 0.0
        %v790 = vmax.f32 %v768, 0.0
        %v791 = vmax.f32 %v773, 0.0
        %v792 = vld [vmem:[#allocation8] sm:$0xff]
        %v793 = vld [vmem:[#allocation8 + $0x8] sm:$0xff]
        %v794 = vld [vmem:[#allocation8 + $0x10] sm:$0xff]
        %v795 = vld [vmem:[#allocation8 + $0x18] sm:$0xff]
        %v796 = vld [vmem:[#allocation8 + $0x20] sm:$0xff]
        %v797 = vld [vmem:[#allocation8 + $0x28] sm:$0xff]
        %v798 = vld [vmem:[#allocation8 + $0x30] sm:$0xff]
        %v799 = vld [vmem:[#allocation8 + $0x38] sm:$0xff]
        %v800 = vld [vmem:[#allocation8 + $0x40] sm:$0xff]
        %v801 = vld [vmem:[#allocation8 + $0x48] sm:$0xff]
        %v802 = vld [vmem:[#allocation8 + $0x50] sm:$0xff]
        %v803 = vld [vmem:[#allocation8 + $0x58] sm:$0xff]
        %v804 = vld [vmem:[#allocation8 + $0x60] sm:$0xff]
        %v805 = vld [vmem:[#allocation8 + $0x68] sm:$0xff]
        %v806 = vld [vmem:[#allocation8 + $0x70] sm:$0xff]
        %v807 = vld [vmem:[#allocation8 + $0x78] sm:$0xff]
        %v808 = vld [vmem:[%s6] sm:$0x1]
        %v810 = vlaneseq
        %v811 = vshrl.u32 %v810, 7
        %v812 = vsub.s32 0, %v811
        %v813 = vrot.slane %v808, %v812
        %815 = vmatprep.subr.mxu0 0.0
        %816 = vmatpush1.msra.mxu0 %v792
        %817 = vmatprep.subr.mxu0 0.0
        %818 = vmatpush1.msra.mxu0 %v793
        %819 = vmatprep.subr.mxu0 0.0
        %820 = vmatpush1.msra.mxu0 %v794
        %821 = vmatprep.subr.mxu0 0.0
        %822 = vmatpush1.msra.mxu0 %v795
        %823 = vmatprep.subr.mxu0 0.0
        %824 = vmatpush1.msra.mxu0 %v796
        %825 = vmatprep.subr.mxu0 0.0
        %826 = vmatpush1.msra.mxu0 %v797
        %827 = vmatprep.subr.mxu0 0.0
        %828 = vmatpush1.msra.mxu0 %v798
        %829 = vmatprep.subr.mxu0 0.0
        %830 = vmatpush1.msra.mxu0 %v799
        %831 = vmatprep.subr.mxu0 0.0
        %832 = vmatpush1.msra.mxu0 %v800
        %833 = vmatprep.subr.mxu0 0.0
        %834 = vmatpush1.msra.mxu0 %v801
        %835 = vmatprep.subr.mxu0 0.0
        %836 = vmatpush1.msra.mxu0 %v802
        %837 = vmatprep.subr.mxu0 0.0
        %838 = vmatpush1.msra.mxu0 %v803
        %839 = vmatprep.subr.mxu0 0.0
        %840 = vmatpush1.msra.mxu0 %v804
        %841 = vmatprep.subr.mxu0 0.0
        %842 = vmatpush1.msra.mxu0 %v805
        %843 = vmatprep.subr.mxu0 0.0
        %844 = vmatpush1.msra.mxu0 %v806
        %845 = vmatprep.subr.mxu0 0.0
        %846 = vmatpush1.msra.mxu0 %v807
        %847 = vmatprep.subr.mxu0 0.0
        %848 = vmatpush1.msra.mxu0 0.0
        %849 = vmatprep.subr.mxu0 0.0
        %850 = vmatpush1.msra.mxu0 0.0
        %851 = vmatprep.subr.mxu0 0.0
        %852 = vmatpush1.msra.mxu0 0.0
        %853 = vmatprep.subr.mxu0 0.0
        %854 = vmatpush1.msra.mxu0 0.0
        %855 = vmatprep.subr.mxu0 0.0
        %856 = vmatpush1.msra.mxu0 0.0
        %857 = vmatprep.subr.mxu0 0.0
        %858 = vmatpush1.msra.mxu0 0.0
        %859 = vmatprep.subr.mxu0 0.0
        %860 = vmatpush1.msra.mxu0 0.0
        %861 = vmatprep.subr.mxu0 0.0
        %862 = vmatpush1.msra.mxu0 0.0
        %863 = vmatprep.subr.mxu0 0.0
        %864 = vmatpush1.msra.mxu0 0.0
        %865 = vmatprep.subr.mxu0 0.0
        %866 = vmatpush1.msra.mxu0 0.0
        %867 = vmatprep.subr.mxu0 0.0
        %868 = vmatpush1.msra.mxu0 0.0
        %869 = vmatprep.subr.mxu0 0.0
        %870 = vmatpush1.msra.mxu0 0.0
        %871 = vmatprep.subr.mxu0 0.0
        %872 = vmatpush1.msra.mxu0 0.0
        %873 = vmatprep.subr.mxu0 0.0
        %874 = vmatpush1.msra.mxu0 0.0
        %875 = vmatprep.subr.mxu0 0.0
        %876 = vmatpush1.msra.mxu0 0.0
        %877 = vmatprep.subr.mxu0 0.0
        %878 = vmatpush1.msra.mxu0 0.0
        %879 = vmatprep.mubr.f32.mxu0 0.0
        %880 = vmatmul.mubr.f32.gmra.mrb[0].mxu0 %v592
        %v881 = vpop.f32.mrb[0].mxu0
        %v882 = vadd.f32 %v813, %v881
        %v883 = vpop.f32.mrb[0].mxu0
        %884 = vmatprep.mubr.f32.mxu0 0.0
        %885 = vmatmul.mubr.f32.gmra.mrb[0].mxu0 %v593
        %v886 = vpop.f32.mrb[0].mxu0
        %v887 = vadd.f32 %v813, %v886
        %v888 = vpop.f32.mrb[0].mxu0
        %889 = vmatprep.mubr.f32.mxu0 0.0
        %890 = vmatmul.mubr.f32.gmra.mrb[0].mxu0 %v594
        %v891 = vpop.f32.mrb[0].mxu0
        %v892 = vadd.f32 %v813, %v891
        %v893 = vpop.f32.mrb[0].mxu0
        %894 = vmatprep.mubr.f32.mxu0 0.0
        %895 = vmatmul.mubr.f32.gmra.mrb[0].mxu0 %v595
        %v896 = vpop.f32.mrb[0].mxu0
        %v897 = vadd.f32 %v813, %v896
        %v898 = vpop.f32.mrb[0].mxu0
        %899 = vmatprep.mubr.f32.mxu0 0.0
        %900 = vmatmul.mubr.f32.gmra.mrb[0].mxu0 %v596
        %v901 = vpop.f32.mrb[0].mxu0
        %v902 = vadd.f32 %v813, %v901
        %v903 = vpop.f32.mrb[0].mxu0
        %904 = vmatprep.mubr.f32.mxu0 0.0
        %905 = vmatmul.mubr.f32.gmra.mrb[0].mxu0 %v597
        %v906 = vpop.f32.mrb[0].mxu0
        %v907 = vadd.f32 %v813, %v906
        %v908 = vpop.f32.mrb[0].mxu0
        %909 = vmatprep.mubr.f32.mxu0 0.0
        %910 = vmatmul.mubr.f32.gmra.mrb[0].mxu0 %v598
        %v911 = vpop.f32.mrb[0].mxu0
        %v912 = vadd.f32 %v813, %v911
        %v913 = vpop.f32.mrb[0].mxu0
        %914 = vmatprep.mubr.f32.mxu0 0.0
        %915 = vmatmul.mubr.f32.gmra.mrb[0].mxu0 %v599
        %v916 = vpop.f32.mrb[0].mxu0
        %v917 = vadd.f32 %v813, %v916
        %v918 = vpop.f32.mrb[0].mxu0
        %919 = vmatprep.mubr.f32.mxu0 0.0
        %920 = vmatmul.mubr.f32.gmra.mrb[0].mxu0 %v600
        %v921 = vpop.f32.mrb[0].mxu0
        %v922 = vadd.f32 %v813, %v921
        %v923 = vpop.f32.mrb[0].mxu0
        %924 = vmatprep.mubr.f32.mxu0 0.0
        %925 = vmatmul.mubr.f32.gmra.mrb[0].mxu0 %v601
        %v926 = vpop.f32.mrb[0].mxu0
        %v927 = vadd.f32 %v813, %v926
        %v928 = vpop.f32.mrb[0].mxu0
        %929 = vmatprep.mubr.f32.mxu0 0.0
        %930 = vmatmul.mubr.f32.gmra.mrb[0].mxu0 %v602
        %v931 = vpop.f32.mrb[0].mxu0
        %v932 = vadd.f32 %v813, %v931
        %v933 = vpop.f32.mrb[0].mxu0
        %934 = vmatprep.mubr.f32.mxu0 0.0
        %935 = vmatmul.mubr.f32.gmra.mrb[0].mxu0 %v603
        %v936 = vpop.f32.mrb[0].mxu0
        %v937 = vadd.f32 %v813, %v936
        %v938 = vpop.f32.mrb[0].mxu0
        %939 = vmatprep.mubr.f32.mxu0 0.0
        %940 = vmatmul.mubr.f32.gmra.mrb[0].mxu0 %v604
        %v941 = vpop.f32.mrb[0].mxu0
        %v942 = vadd.f32 %v813, %v941
        %v943 = vpop.f32.mrb[0].mxu0
        %944 = vmatprep.mubr.f32.mxu0 0.0
        %945 = vmatmul.mubr.f32.gmra.mrb[0].mxu0 %v605
        %v946 = vpop.f32.mrb[0].mxu0
        %v947 = vadd.f32 %v813, %v946
        %v948 = vpop.f32.mrb[0].mxu0
        %949 = vmatprep.mubr.f32.mxu0 0.0
        %950 = vmatmul.mubr.f32.gmra.mrb[0].mxu0 %v606
        %v951 = vpop.f32.mrb[0].mxu0
        %v952 = vadd.f32 %v813, %v951
        %v953 = vpop.f32.mrb[0].mxu0
        %954 = vmatprep.mubr.f32.mxu0 0.0
        %955 = vmatmul.mubr.f32.gmra.mrb[0].mxu0 %v607
        %v956 = vpop.f32.mrb[0].mxu0
        %v957 = vadd.f32 %v813, %v956
        %v958 = vpop.f32.mrb[0].mxu0
        %959 = vdwg.mxu0
        %v960 = vld [vmem:[%s367] sm:$0xff]
        %v961 = vld [vmem:[%s367 + $0x8] sm:$0xff]
        %v962 = vld [vmem:[%s367 + $0x10] sm:$0xff]
        %v963 = vld [vmem:[%s367 + $0x18] sm:$0xff]
        %v964 = vld [vmem:[%s367 + $0x20] sm:$0xff]
        %v965 = vld [vmem:[%s367 + $0x28] sm:$0xff]
        %v966 = vld [vmem:[%s367 + $0x30] sm:$0xff]
        %v967 = vld [vmem:[%s367 + $0x38] sm:$0xff]
        %v968 = vld [vmem:[%s367 + $0x40] sm:$0xff]
        %v969 = vld [vmem:[%s367 + $0x48] sm:$0xff]
        %v970 = vld [vmem:[%s367 + $0x50] sm:$0xff]
        %v971 = vld [vmem:[%s367 + $0x58] sm:$0xff]
        %v972 = vld [vmem:[%s367 + $0x60] sm:$0xff]
        %v973 = vld [vmem:[%s367 + $0x68] sm:$0xff]
        %v974 = vld [vmem:[%s367 + $0x70] sm:$0xff]
        %v975 = vld [vmem:[%s367 + $0x78] sm:$0xff]
        %v976 = vmul.f32 %v882, 1.442695
        %v977 = vpow.pop %v976
        %v978 = vmul.f32 %v887, 1.442695
        %v979 = vpow.pop %v978
        %v980 = vmul.f32 %v892, 1.442695
        %v981 = vpow.pop %v980
        %v982 = vmul.f32 %v897, 1.442695
        %v983 = vpow.pop %v982
        %v984 = vmul.f32 %v902, 1.442695
        %v985 = vpow.pop %v984
        %v986 = vmul.f32 %v907, 1.442695
        %v987 = vpow.pop %v986
        %v988 = vmul.f32 %v912, 1.442695
        %v989 = vpow.pop %v988
        %v990 = vmul.f32 %v917, 1.442695
        %v991 = vpow.pop %v990
        %v992 = vmul.f32 %v922, 1.442695
        %v993 = vpow.pop %v992
        %v994 = vmul.f32 %v927, 1.442695
        %v995 = vpow.pop %v994
        %v996 = vmul.f32 %v932, 1.442695
        %v997 = vpow.pop %v996
        %v998 = vmul.f32 %v937, 1.442695
        %v999 = vpow.pop %v998
        %v1000 = vmul.f32 %v942, 1.442695
        %v1001 = vpow.pop %v1000
        %v1002 = vmul.f32 %v947, 1.442695
        %v1003 = vpow.pop %v1002
        %v1004 = vmul.f32 %v952, 1.442695
        %v1005 = vpow.pop %v1004
        %v1006 = vmul.f32 %v957, 1.442695
        %v1007 = vpow.pop %v1006
        %v1008 = vmul.f32 %v960, %v977
        %v1009 = vmul.f32 %v961, %v979
        %v1010 = vmul.f32 %v962, %v981
        %v1011 = vmul.f32 %v963, %v983
        %v1012 = vmul.f32 %v964, %v985
        %v1013 = vmul.f32 %v965, %v987
        %v1014 = vmul.f32 %v966, %v989
        %v1015 = vmul.f32 %v967, %v991
        %v1016 = vmul.f32 %v968, %v993
        %v1017 = vmul.f32 %v969, %v995
        %v1018 = vmul.f32 %v970, %v997
        %v1019 = vmul.f32 %v971, %v999
        %v1020 = vmul.f32 %v972, %v1001
        %v1021 = vmul.f32 %v973, %v1003
        %v1022 = vmul.f32 %v974, %v1005
        %v1023 = vmul.f32 %v975, %v1007
        %v1024 = vadd.f32 %v1008, %v776
        %v1025 = vadd.f32 %v1009, %v777
        %v1026 = vadd.f32 %v1010, %v778
        %v1027 = vadd.f32 %v1011, %v779
        %v1028 = vadd.f32 %v1012, %v780
        %v1029 = vadd.f32 %v1013, %v781
        %v1030 = vadd.f32 %v1014, %v782
        %v1031 = vadd.f32 %v1015, %v783
        %v1032 = vadd.f32 %v1016, %v784
        %v1033 = vadd.f32 %v1017, %v785
        %v1034 = vadd.f32 %v1018, %v786
        %v1035 = vadd.f32 %v1019, %v787
        %v1036 = vadd.f32 %v1020, %v788
        %v1037 = vadd.f32 %v1021, %v789
        %v1038 = vadd.f32 %v1022, %v790
        %v1039 = vadd.f32 %v1023, %v791
        %1040 = vst [vmem:[%s404] sm:$0xff] %v1024
        %1041 = vst [vmem:[%s404 + $0x8] sm:$0xff] %v1025
        %1042 = vst [vmem:[%s404 + $0x10] sm:$0xff] %v1026
        %1043 = vst [vmem:[%s404 + $0x18] sm:$0xff] %v1027
        %1044 = vst [vmem:[%s404 + $0x20] sm:$0xff] %v1028
        %1045 = vst [vmem:[%s404 + $0x28] sm:$0xff] %v1029
        %1046 = vst [vmem:[%s404 + $0x30] sm:$0xff] %v1030
        %1047 = vst [vmem:[%s404 + $0x38] sm:$0xff] %v1031
        %1048 = vst [vmem:[%s404 + $0x40] sm:$0xff] %v1032
        %1049 = vst [vmem:[%s404 + $0x48] sm:$0xff] %v1033
        %1050 = vst [vmem:[%s404 + $0x50] sm:$0xff] %v1034
        %1051 = vst [vmem:[%s404 + $0x58] sm:$0xff] %v1035
        %1052 = vst [vmem:[%s404 + $0x60] sm:$0xff] %v1036
        %1053 = vst [vmem:[%s404 + $0x68] sm:$0xff] %v1037
        %1054 = vst [vmem:[%s404 + $0x70] sm:$0xff] %v1038
        %1055 = vst [vmem:[%s404 + $0x78] sm:$0xff] %v1039
        %s1056 = sand.u32 %s213, 1
        %s1057 = scalar_lea.sflag [#allocation4], %s1056
        %s1058 = sand.u32 %s213, 1
        %s1059 = smul.addr %s1058, 128
        %s1060 = scalar_lea.vmem [#allocation11], %s1059
        // Predicated region
        $region73: #{tpu_custom_call.1} parent=51 // pred_check
          %p1061 = pneg %p223
        $region74: #{tpu_custom_call.1} parent=51 // pred_check_branch
          %1063 = sbr.rel (%p1061) target = $region76
        $region75: #{tpu_custom_call.1} parent=51 // pred_region
          %s1064 = smul.u32 16, %s27
          %s1066 = ssub.s32 2048, 2048
          %1067 = vsyncadd %s1057, %s1066
          %s1068 = smul.addr %s1064, 128
          %s1069 = scalar_lea.hbm %s8, %s1068
          %s1070 = sshll.u32 %s1060, 4
          %s1071 = int_to_ptr.vmem [resolvable:$true] %s1070
          %1076 = dma.vmem_to_hbm [thread:$0]  %s1071, 2048, %s1069, %s1057, 128, 128, 8
        $region76: #{tpu_custom_call.1} parent=51 // pred_fallthru
          _
      $region52: #{tpu_custom_call.1} parent=5 // pred_fallthru
        _
      %p1077 = scmp.le.s32.totalorder 2, %s22
      // Predicated region
      $region77: #{tpu_custom_call.1} parent=5 // pred_check
        %p1078 = pneg %p1077
      $region78: #{tpu_custom_call.1} parent=5 // pred_check_branch
        %1080 = sbr.rel (%p1078) target = $region80
      $region79: #{tpu_custom_call.1} parent=5 // pred_region
        %s1081 = ssub.s32 %s22, 2
        // Predicated region
        $region81: #{tpu_custom_call.1} parent=79 // pred_check
          %p1082 = pneg %p229
        $region82: #{tpu_custom_call.1} parent=79 // pred_check_branch
          %1084 = sbr.rel (%p1082) target = $region84
        $region83: #{tpu_custom_call.1} parent=79 // pred_region
          %s1085 = sand.u32 %s214, 1
          %s1086 = scalar_lea.sflag [#allocation4], %s1085
          %s1087 = sand.u32 %s214, 1
          %s1088 = smul.addr %s1087, 128
          %s1089 = scalar_lea.vmem [#allocation11], %s1088
          %1090 = dma.done %s1086, 2048
        $region84: #{tpu_custom_call.1} parent=79 // pred_fallthru
          _
      $region80: #{tpu_custom_call.1} parent=5 // pred_fallthru
        _
    $region6: #{tpu_custom_call.1} parent=1 // loop_footer
      %s26 = sadd.s32 1, %s22
    $region7: #{tpu_custom_call.1} parent=1 // loop_footer_branch
      %21 = sbr.rel target = $region3
    $region8: #{tpu_custom_call.1} parent=1 // loop_exit
      _
    %1091 = vsyncpa [#allocation3], 1
    %s1092 = scalar_lea.sflag [#allocation3], 1
    %1093 = vsyncpa %s1092, 1
    %1094 = vsyncpa [#allocation6], 1
    %1095 = vsyncpa [#allocation9], 1
    %1096 = vsyncpa [#allocation4], 1
    %s1097 = scalar_lea.sflag [#allocation4], 1
    %1098 = vsyncpa %s1097, 1

</llo_original>
